<compile_context>
chip_gen: v6e
topology: v6e:2x2x1
jax: 0.10.0
libtpu: 0.0.40
codegen_flags: <defaults>
</compile_context>

<pallas_src>
import jax
import jax.numpy as jnp
from jax.experimental import pallas as pl
from jax.experimental.pallas import tpu as pltpu


# --------------------------------------------------------------------------
# Kernels: one batch tile, all weights resident in VMEM.
# --------------------------------------------------------------------------
def _critic_kernel_fused(x_ref, u_ref,
                         w1x_ref, w1u_ref, b1_ref,
                         w2_ref, b2_ref,
                         w3_ref, b3_ref,
                         q_ref):
    """Small-H path: both heads packed along the lane dim (width padded to a
    multiple of 128); layer 2 is block-diagonal."""
    cd = w2_ref.dtype
    h = (jnp.dot(x_ref[...], w1x_ref[...], preferred_element_type=jnp.float32)
         + jnp.dot(u_ref[...], w1u_ref[...], preferred_element_type=jnp.float32)
         + b1_ref[...])
    h = jnp.maximum(h, 0.0).astype(cd)

    g = jnp.dot(h, w2_ref[...], preferred_element_type=jnp.float32) + b2_ref[...]
    g = jnp.maximum(g, 0.0).astype(cd)

    q = jnp.dot(g, w3_ref[...], preferred_element_type=jnp.float32) + b3_ref[...]
    q_ref[...] = q.astype(q_ref.dtype)


def _critic_kernel_split(x_ref, u_ref,
                         w1x_ref, w1u_ref, b1_ref,
                         w2a_ref, w2b_ref, b2_ref,
                         w3_ref, b3_ref,
                         q_ref):
    """Large-H path (H >= 128): layer 2 uses two (H, H) dots on the
    lane-aligned halves of the (TB, 2H) activation (no zero-block matmul)."""
    cd = w2a_ref.dtype
    H = w2a_ref.shape[0]

    h = (jnp.dot(x_ref[...], w1x_ref[...], preferred_element_type=jnp.float32)
         + jnp.dot(u_ref[...], w1u_ref[...], preferred_element_type=jnp.float32)
         + b1_ref[...])
    h = jnp.maximum(h, 0.0).astype(cd)           # (TB, 2H)

    d1 = jnp.dot(h[:, :H], w2a_ref[...], preferred_element_type=jnp.float32)
    d2 = jnp.dot(h[:, H:], w2b_ref[...], preferred_element_type=jnp.float32)
    g = jnp.concatenate([d1, d2], axis=1) + b2_ref[...]
    g = jnp.maximum(g, 0.0).astype(cd)           # (TB, 2H)

    # Layer 3 stays block-diagonal (2H, 2): tiny, produces [q1 | q2] directly.
    q = jnp.dot(g, w3_ref[...], preferred_element_type=jnp.float32) + b3_ref[...]
    q_ref[...] = q.astype(q_ref.dtype)


# --------------------------------------------------------------------------
# Parameter packing (done once, outside the hot path).
# --------------------------------------------------------------------------
def _round_up(x, m):
    return -(-x // m) * m


def pack_critic_params(p, state_dim, dtype=jnp.float32):
    """Pack the 6 per-layer (in, out) weights into the fused twin-head layout.

    H >= 128 : layer 2 kept as two separate (H, H) weights ("split" layout).
    H <  128 : layer 2 block-diagonal, hidden width zero-padded to 128 lanes.
    dtype    : final storage dtype (e.g. jnp.bfloat16) -- cast ONCE here.
    """
    H = p["w2"].shape[0]
    wdt = p["w1"].dtype

    # Layer 1: split along the input into (state, action) halves, heads concat'd.
    w1x = jnp.concatenate([p["w1"][:state_dim], p["w4"][:state_dim]], axis=1)  # (S, 2H)
    w1u = jnp.concatenate([p["w1"][state_dim:], p["w4"][state_dim:]], axis=1)  # (A, 2H)
    b1 = jnp.concatenate([p["b1"], p["b4"]], axis=1)                           # (1, 2H)
    b2 = jnp.concatenate([p["b2"], p["b5"]], axis=1)                           # (1, 2H)
    b3 = jnp.concatenate([p["b3"], p["b6"]], axis=1)                           # (1, 2)

    # Layer 3: block-diagonal (2H, 2) -- negligible cost, keeps [q1 | q2] fused.
    zh1 = jnp.zeros((H, 1), wdt)
    w3 = jnp.block([[p["w3"], zh1], [zh1, p["w6"]]])                           # (2H, 2)

    if H >= 128:
        packed = dict(w1x=w1x, w1u=w1u, b1=b1,
                      w2a=p["w2"], w2b=p["w5"], b2=b2,
                      w3=w3, b3=b3)
    else:
        # Fused block-diagonal layer 2, padded to a full 128-lane block.
        W = 2 * H
        Wp = max(128, _round_up(W, 128))
        pad = Wp - W
        zhh = jnp.zeros((H, H), wdt)
        w2 = jnp.block([[p["w2"], zhh], [zhh, p["w5"]]])                       # (2H, 2H)
        if pad:
            w1x = jnp.pad(w1x, ((0, 0), (0, pad)))
            w1u = jnp.pad(w1u, ((0, 0), (0, pad)))
            b1 = jnp.pad(b1, ((0, 0), (0, pad)))
            w2 = jnp.pad(w2, ((0, pad), (0, pad)))
            b2 = jnp.pad(b2, ((0, 0), (0, pad)))
            w3 = jnp.pad(w3, ((0, pad), (0, 0)))
        packed = dict(w1x=w1x, w1u=w1u, b1=b1, w2=w2, b2=b2, w3=w3, b3=b3)

    return {k: v.astype(dtype) for k, v in packed.items()}


def _batch_tile(B):
    """Batch tile: whole batch if small; otherwise ensure >= 2 grid steps so
    both v7x TensorCores can work (neutral on single-TC v5e/v6e)."""
    if B <= 128:
        return B
    cap = max(128, (B + 1) // 2)          # force at least 2 grid steps
    for tb in (512, 256, 128, 64):
        if tb <= cap and B % tb == 0:
            return tb
    # Ragged last block: output rows are masked; safe because the math is
    # strictly row-independent (no cross-row reductions).
    return 128


# --------------------------------------------------------------------------
# Wrapper: equivalent of Critic.forward -> (q1, q2), each (B, 1).
# (Critic.Q1 is simply the first returned tensor.)
# --------------------------------------------------------------------------
def critic_forward(x, u, packed):
    B, S = x.shape
    A = u.shape[1]

    cd = packed["w1x"].dtype              # compute dtype chosen at pack time
    x = x.astype(cd)
    u = u.astype(cd)

    TB = _batch_tile(B)
    num_blocks = pl.cdiv(B, TB)
    split = "w2a" in packed

    def full_spec(arr):
        return pl.BlockSpec(arr.shape, lambda i, _n=arr.ndim: (0,) * _n)

    if split:
        kernel = _critic_kernel_split
        weight_keys = ("w1x", "w1u", "b1", "w2a", "w2b", "b2", "w3", "b3")
    else:
        kernel = _critic_kernel_fused
        weight_keys = ("w1x", "w1u", "b1", "w2", "b2", "w3", "b3")
    weights = [packed[k] for k in weight_keys]

    in_specs = [pl.BlockSpec((TB, S), lambda i: (i, 0)),
                pl.BlockSpec((TB, A), lambda i: (i, 0))]
    in_specs += [full_spec(w) for w in weights]
    out_spec = pl.BlockSpec((TB, 2), lambda i: (i, 0))

    # --- advisory cost estimate for XLA scheduling around this call ---
    itemsize = jnp.dtype(cd).itemsize
    weight_bytes = sum(int(w.size) * w.dtype.itemsize for w in weights)
    W1 = packed["w1x"].shape[1]           # fused/padded hidden width (>= 2H)
    if split:
        H = packed["w2a"].shape[0]
        l2_flops = 2 * (2 * B * H * H)
    else:
        l2_flops = 2 * B * W1 * W1
    flops = 2 * B * (S + A) * W1 + l2_flops + 2 * B * packed["w3"].shape[0] * 2
    bytes_accessed = int(weight_bytes + (x.size + u.size) * itemsize + B * 2 * 4)
    cost = pl.CostEstimate(flops=int(flops), transcendentals=0,
                           bytes_accessed=bytes_accessed)

    # --- VMEM budget: double-buffered weights + tiles + f32 intermediates ---
    footprint = (2 * weight_bytes
                 + 2 * TB * (S + A + 2) * itemsize
                 + 4 * TB * W1 * 4)
    vmem_limit = None
    if footprint > 12 * 2 ** 20:
        vmem_limit = int(min(48 * 2 ** 20, footprint * 3 // 2 + 2 * 2 ** 20))

    q = pl.pallas_call(
        kernel,
        out_shape=jax.ShapeDtypeStruct((B, 2), jnp.float32),
        grid=(num_blocks,),
        in_specs=in_specs,
        out_specs=out_spec,
        compiler_params=pltpu.CompilerParams(
            dimension_semantics=("parallel",),
            vmem_limit_bytes=vmem_limit),
        cost_estimate=cost,
    )(x, u, *weights)

    # Split the lane-merged (B, 2) output into the module's (q1, q2).
    return q[:, 0:1], q[:, 1:2]


# --------------------------------------------------------------------------
# Synthetic init (matches PyTorch nn.Linear default), stored as (in, out).
# --------------------------------------------------------------------------
def init_critic_params(key, critic_input_dim, n_hidden):
    keys = jax.random.split(key, 12)

    def lin(kw, kb, fan_in, fan_out):
        bound = 1.0 / jnp.sqrt(jnp.float32(fan_in))
        w = jax.random.uniform(kw, (fan_in, fan_out), jnp.float32, -bound, bound)
        b = jax.random.uniform(kb, (1, fan_out), jnp.float32, -bound, bound)
        return w, b

    w1, b1 = lin(keys[0], keys[1], critic_input_dim, n_hidden)
    w2, b2 = lin(keys[2], keys[3], n_hidden, n_hidden)
    w3, b3 = lin(keys[4], keys[5], n_hidden, 1)
    w4, b4 = lin(keys[6], keys[7], critic_input_dim, n_hidden)
    w5, b5 = lin(keys[8], keys[9], n_hidden, n_hidden)
    w6, b6 = lin(keys[10], keys[11], n_hidden, 1)
    return dict(w1=w1, b1=b1, w2=w2, b2=b2, w3=w3, b3=b3,
                w4=w4, b4=b4, w5=w5, b5=b5, w6=w6, b6=b6)


def _reference_forward(x, u, p):
    xu = jnp.concatenate([x, u], axis=1)
    h1 = jax.nn.relu(xu @ p["w1"] + p["b1"])
    h1 = jax.nn.relu(h1 @ p["w2"] + p["b2"])
    q1 = h1 @ p["w3"] + p["b3"]
    h2 = jax.nn.relu(xu @ p["w4"] + p["b4"])
    h2 = jax.nn.relu(h2 @ p["w5"] + p["b5"])
    q2 = h2 @ p["w6"] + p["b6"]
    return q1, q2


if __name__ == "__main__":
    key = jax.random.PRNGKey(0)
    kx, ku, kp, kx2, ku2, kp2 = jax.random.split(key, 6)

    # --- Test 1: small shapes, fused (padded) path, f32 ---
    batch, state_dim, action_dim, n_hidden = 2, 12, 4, 32
    x = jax.random.normal(kx, (batch, state_dim), jnp.float32)
    u = jax.random.normal(ku, (batch, action_dim), jnp.float32)
    params = init_critic_params(kp, state_dim + action_dim, n_hidden)

    packed = pack_critic_params(params, state_dim)            # f32, packed once
    q1, q2 = critic_forward(x, u, packed)
    q1 = jax.block_until_ready(q1)
    q2 = jax.block_until_ready(q2)

    r1, r2 = _reference_forward(x, u, params)
    assert q1.shape == (batch, 1) and q2.shape == (batch, 1)
    assert jnp.allclose(q1, r1, atol=1e-5), "q1 mismatch (f32 fused)"
    assert jnp.allclose(q2, r2, atol=1e-5), "q2 mismatch (f32 fused)"

    # --- Test 2: bf16 weights packed once (looser tolerance) ---
    packed_bf16 = pack_critic_params(params, state_dim, dtype=jnp.bfloat16)
    q1b, q2b = critic_forward(x, u, packed_bf16)
    q1b = jax.block_until_ready(q1b)
    assert jnp.allclose(q1b, r1, atol=5e-2, rtol=5e-2), "q1 mismatch (bf16)"
    assert jnp.allclose(q2b, r2, atol=5e-2, rtol=5e-2), "q2 mismatch (bf16)"

    # --- Test 3: H >= 128 split-layer-2 path, multi-step batch grid ---
    batch2, n_hidden2 = 256, 128
    x2 = jax.random.normal(kx2, (batch2, state_dim), jnp.float32)
    u2 = jax.random.normal(ku2, (batch2, action_dim), jnp.float32)
    params2 = init_critic_params(kp2, state_dim + action_dim, n_hidden2)
    packed2 = pack_critic_params(params2, state_dim)
    s1, s2 = critic_forward(x2, u2, packed2)
    s1 = jax.block_until_ready(s1)
    r1b, r2b = _reference_forward(x2, u2, params2)
    assert s1.shape == (batch2, 1) and s2.shape == (batch2, 1)
    assert jnp.allclose(s1, r1b, atol=1e-4), "q1 mismatch (f32 split)"
    assert jnp.allclose(s2, r2b, atol=1e-4), "q2 mismatch (f32 split)"

    print("KERNEL_OK")
</pallas_src>

<mosaic_0001>
module attributes {stable_mosaic.version = 11 : i64} {
  func.func @_critic_kernel_fused(%arg0: i32, %arg1: memref<2x12xf32, #tpu.memory_space<vmem>>, %arg2: memref<2x4xf32, #tpu.memory_space<vmem>>, %arg3: memref<12x128xf32, #tpu.memory_space<vmem>>, %arg4: memref<4x128xf32, #tpu.memory_space<vmem>>, %arg5: memref<1x128xf32, #tpu.memory_space<vmem>>, %arg6: memref<128x128xf32, #tpu.memory_space<vmem>>, %arg7: memref<1x128xf32, #tpu.memory_space<vmem>>, %arg8: memref<128x2xf32, #tpu.memory_space<vmem>>, %arg9: memref<1x2xf32, #tpu.memory_space<vmem>>, %arg10: memref<2x2xf32, #tpu.memory_space<vmem>>) attributes {dimension_semantics = [#tpu.dimension_semantics<parallel>], iteration_bounds = array<i64: 1>, scalar_prefetch = 0 : i64, scratch_operands = 0 : i64, tpu.core_type = #tpu.core_type<tc>, window_params = [{transform_indices = @transform_0, window_bounds = array<i64: 2, 12>}, {transform_indices = @transform_1, window_bounds = array<i64: 2, 4>}, {pipeline_mode = #tpu.pipeline_mode<synchronous>, transform_indices = @transform_2, window_bounds = array<i64: 12, 128>}, {pipeline_mode = #tpu.pipeline_mode<synchronous>, transform_indices = @transform_3, window_bounds = array<i64: 4, 128>}, {pipeline_mode = #tpu.pipeline_mode<synchronous>, transform_indices = @transform_4, window_bounds = array<i64: 1, 128>}, {pipeline_mode = #tpu.pipeline_mode<synchronous>, transform_indices = @transform_5, window_bounds = array<i64: 128, 128>}, {pipeline_mode = #tpu.pipeline_mode<synchronous>, transform_indices = @transform_6, window_bounds = array<i64: 1, 128>}, {pipeline_mode = #tpu.pipeline_mode<synchronous>, transform_indices = @transform_7, window_bounds = array<i64: 128, 2>}, {pipeline_mode = #tpu.pipeline_mode<synchronous>, transform_indices = @transform_8, window_bounds = array<i64: 1, 2>}, {transform_indices = @transform_9, window_bounds = array<i64: 2, 2>}]} {
    %c0 = arith.constant 0 : index
    %c0_0 = arith.constant 0 : index
    %0 = vector.load %arg1[%c0, %c0_0] : memref<2x12xf32, #tpu.memory_space<vmem>>, vector<2x12xf32>
    %c0_1 = arith.constant 0 : index
    %c0_2 = arith.constant 0 : index
    %1 = vector.load %arg3[%c0_1, %c0_2] : memref<12x128xf32, #tpu.memory_space<vmem>>, vector<12x128xf32>
    %cst = arith.constant dense<0.000000e+00> : vector<2x128xf32>
    %2 = tpu.matmul %0, %1, %cst {dimension_numbers = #tpu.dot_dimension_numbers<[1], [0], [0], [1], [0, 0, 1, 1], [], []>} : vector<2x12xf32>, vector<12x128xf32>, vector<2x128xf32> -> vector<2x128xf32>
    %c0_3 = arith.constant 0 : index
    %c0_4 = arith.constant 0 : index
    %3 = vector.load %arg2[%c0_3, %c0_4] : memref<2x4xf32, #tpu.memory_space<vmem>>, vector<2x4xf32>
    %c0_5 = arith.constant 0 : index
    %c0_6 = arith.constant 0 : index
    %4 = vector.load %arg4[%c0_5, %c0_6] : memref<4x128xf32, #tpu.memory_space<vmem>>, vector<4x128xf32>
    %cst_7 = arith.constant dense<0.000000e+00> : vector<2x128xf32>
    %5 = tpu.matmul %3, %4, %cst_7 {dimension_numbers = #tpu.dot_dimension_numbers<[1], [0], [0], [1], [0, 0, 1, 1], [], []>} : vector<2x4xf32>, vector<4x128xf32>, vector<2x128xf32> -> vector<2x128xf32>
    %6 = arith.addf %2, %5 : vector<2x128xf32>
    %c0_8 = arith.constant 0 : index
    %c0_9 = arith.constant 0 : index
    %7 = vector.load %arg5[%c0_8, %c0_9] : memref<1x128xf32, #tpu.memory_space<vmem>>, vector<1x128xf32>
    %8 = vector.broadcast %7 : vector<1x128xf32> to vector<2x128xf32>
    %9 = arith.addf %6, %8 : vector<2x128xf32>
    %cst_10 = arith.constant 0.000000e+00 : f32
    %10 = vector.broadcast %cst_10 : f32 to vector<2x128xf32>
    %11 = arith.maximumf %9, %10 : vector<2x128xf32>
    %c0_11 = arith.constant 0 : index
    %c0_12 = arith.constant 0 : index
    %12 = vector.load %arg6[%c0_11, %c0_12] : memref<128x128xf32, #tpu.memory_space<vmem>>, vector<128x128xf32>
    %cst_13 = arith.constant dense<0.000000e+00> : vector<2x128xf32>
    %13 = tpu.matmul %11, %12, %cst_13 {dimension_numbers = #tpu.dot_dimension_numbers<[1], [0], [0], [1], [0, 0, 1, 1], [], []>} : vector<2x128xf32>, vector<128x128xf32>, vector<2x128xf32> -> vector<2x128xf32>
    %c0_14 = arith.constant 0 : index
    %c0_15 = arith.constant 0 : index
    %14 = vector.load %arg7[%c0_14, %c0_15] : memref<1x128xf32, #tpu.memory_space<vmem>>, vector<1x128xf32>
    %15 = vector.broadcast %14 : vector<1x128xf32> to vector<2x128xf32>
    %16 = arith.addf %13, %15 : vector<2x128xf32>
    %cst_16 = arith.constant 0.000000e+00 : f32
    %17 = vector.broadcast %cst_16 : f32 to vector<2x128xf32>
    %18 = arith.maximumf %16, %17 : vector<2x128xf32>
    %c0_17 = arith.constant 0 : index
    %c0_18 = arith.constant 0 : index
    %19 = vector.load %arg8[%c0_17, %c0_18] : memref<128x2xf32, #tpu.memory_space<vmem>>, vector<128x2xf32>
    %cst_19 = arith.constant dense<0.000000e+00> : vector<2x2xf32>
    %20 = tpu.matmul %18, %19, %cst_19 {dimension_numbers = #tpu.dot_dimension_numbers<[1], [0], [0], [1], [0, 0, 1, 1], [], []>} : vector<2x128xf32>, vector<128x2xf32>, vector<2x2xf32> -> vector<2x2xf32>
    %c0_20 = arith.constant 0 : index
    %c0_21 = arith.constant 0 : index
    %21 = vector.load %arg9[%c0_20, %c0_21] : memref<1x2xf32, #tpu.memory_space<vmem>>, vector<1x2xf32>
    %22 = vector.broadcast %21 : vector<1x2xf32> to vector<2x2xf32>
    %23 = arith.addf %20, %22 : vector<2x2xf32>
    %c0_22 = arith.constant 0 : index
    %c0_23 = arith.constant 0 : index
    %24 = vector.load %arg10[%c0_22, %c0_23] : memref<2x2xf32, #tpu.memory_space<vmem>>, vector<2x2xf32>
    tpu.vector_store %arg10[%c0_22, %c0_23], %23 {strides = array<i32>} : memref<2x2xf32, #tpu.memory_space<vmem>>, vector<2x2xf32>,
    return
  }
  func.func @transform_0(%arg0: i32) -> (i32, i32) {
    %c0_i32 = arith.constant 0 : i32
    %c0_i32_0 = arith.constant 0 : i32
    return %arg0, %c0_i32 : i32, i32
  }
  func.func @transform_1(%arg0: i32) -> (i32, i32) {
    %c0_i32 = arith.constant 0 : i32
    %c0_i32_0 = arith.constant 0 : i32
    return %arg0, %c0_i32 : i32, i32
  }
  func.func @transform_2(%arg0: i32) -> (i32, i32) {
    %c0_i32 = arith.constant 0 : i32
    %c0_i32_0 = arith.constant 0 : i32
    %c0_i32_1 = arith.constant 0 : i32
    return %c0_i32, %c0_i32_0 : i32, i32
  }
  func.func @transform_3(%arg0: i32) -> (i32, i32) {
    %c0_i32 = arith.constant 0 : i32
    %c0_i32_0 = arith.constant 0 : i32
    %c0_i32_1 = arith.constant 0 : i32
    return %c0_i32, %c0_i32_0 : i32, i32
  }
  func.func @transform_4(%arg0: i32) -> (i32, i32) {
    %c0_i32 = arith.constant 0 : i32
    %c0_i32_0 = arith.constant 0 : i32
    %c0_i32_1 = arith.constant 0 : i32
    return %c0_i32, %c0_i32_0 : i32, i32
  }
  func.func @transform_5(%arg0: i32) -> (i32, i32) {
    %c0_i32 = arith.constant 0 : i32
    %c0_i32_0 = arith.constant 0 : i32
    %c0_i32_1 = arith.constant 0 : i32
    return %c0_i32, %c0_i32_0 : i32, i32
  }
  func.func @transform_6(%arg0: i32) -> (i32, i32) {
    %c0_i32 = arith.constant 0 : i32
    %c0_i32_0 = arith.constant 0 : i32
    %c0_i32_1 = arith.constant 0 : i32
    return %c0_i32, %c0_i32_0 : i32, i32
  }
  func.func @transform_7(%arg0: i32) -> (i32, i32) {
    %c0_i32 = arith.constant 0 : i32
    %c0_i32_0 = arith.constant 0 : i32
    %c0_i32_1 = arith.constant 0 : i32
    return %c0_i32, %c0_i32_0 : i32, i32
  }
  func.func @transform_8(%arg0: i32) -> (i32, i32) {
    %c0_i32 = arith.constant 0 : i32
    %c0_i32_0 = arith.constant 0 : i32
    %c0_i32_1 = arith.constant 0 : i32
    return %c0_i32, %c0_i32_0 : i32, i32
  }
  func.func @transform_9(%arg0: i32) -> (i32, i32) {
    %c0_i32 = arith.constant 0 : i32
    %c0_i32_0 = arith.constant 0 : i32
    return %arg0, %c0_i32 : i32, i32
  }
}

</mosaic_0001>

<llo_original>
// kernel: tpu_custom_call.1
$region0: #{tpu_custom_call.1}
  #allocation0 [shape = 'u32[]', space=smem, size = 0x4, offset = 0x4, fixed_abs, tag = 'smem constant byte address 0x4 - core index']
  #allocation1 [shape = 'u32[144,128]{1,0:T(1,128)}', space=vmem, size = 0x12000, scoped, tag = 'internal scratch']
  %s0 = inlined_call_operand.vmem [shape: f32[2,12], index: 0, kind: input, shape index: {}]
  %s1 = inlined_call_operand.vmem [shape: f32[2,4], index: 1, kind: input, shape index: {}]
  %s2 = inlined_call_operand.hbm [shape: f32[12,128], index: 2, kind: input, shape index: {}]
  %s3 = inlined_call_operand.vmem [shape: f32[4,128], index: 3, kind: input, shape index: {}]
  %s4 = inlined_call_operand.vmem [shape: f32[1,128], index: 4, kind: input, shape index: {}]
  %s5 = inlined_call_operand.vmem [shape: f32[128,128], index: 5, kind: input, shape index: {}]
  %s6 = inlined_call_operand.vmem [shape: f32[1,128], index: 6, kind: input, shape index: {}]
  %s7 = inlined_call_operand.vmem [shape: f32[128,2], index: 7, kind: input, shape index: {}]
  %s8 = inlined_call_operand.vmem [shape: f32[1,2], index: 8, kind: input, shape index: {}]
  %s9 = inlined_call_operand.hbm [shape: f32[2,2], index: 9, kind: output, shape index: {}]
  %s10 = sld [smem:[#allocation0]]
  $region50: #{tpu_custom_call.1} parent=0
    _
  %s12 = ssub.s32 1, %s10
  %s13 = scalar_select 0, %s12, %s10
  $region1: #{tpu_custom_call.1} parent=0
    #allocation2 [shape = 'u8[8192]{0}', space=vmem, size = 0x2000, scoped, tag = 'input window, operand 2, single buffered']
    #allocation3 [shape = 's32[1]{0}', space=sflag, size = 0x4, scoped, tag = 'scoped memory for tpu_custom_call.1']
    #allocation4 [shape = 's32[1]{0}', space=sflag, size = 0x4, scoped, tag = 'scoped memory for tpu_custom_call.1']
    #allocation5 [shape = 'u8[1024]{0}', space=vmem, size = 0x400, scoped, tag = 'output window, operand 0, single buffered']
    %14 = vsyncpa [#allocation3], 0
    %15 = vsyncpa [#allocation4], 0
    // Predicated region
    $region2: #{tpu_custom_call.1} parent=1 // pred_check
      _
    $region3: #{tpu_custom_call.1} parent=1 // pred_check_branch
      %17 = sbr.rel (0) target = $region5
    $region4: #{tpu_custom_call.1} parent=1 // pred_region
      _
    $region5: #{tpu_custom_call.1} parent=1 // pred_fallthru
      _
    // Predicated region
    $region6: #{tpu_custom_call.1} parent=1 // pred_check
      _
    $region7: #{tpu_custom_call.1} parent=1 // pred_check_branch
      %19 = sbr.rel (0) target = $region9
    $region8: #{tpu_custom_call.1} parent=1 // pred_region
      _
    $region9: #{tpu_custom_call.1} parent=1 // pred_fallthru
      _
    // Predicated region
    $region10: #{tpu_custom_call.1} parent=1 // pred_check
      _
    $region11: #{tpu_custom_call.1} parent=1 // pred_check_branch
      %21 = sbr.rel (0) target = $region13
    $region12: #{tpu_custom_call.1} parent=1 // pred_region
      %s23 = ssub.s32 256, 256
      %24 = vsyncadd [#allocation3], %s23
      %s25 = sshll.u32 [#allocation2], 4
      %s26 = int_to_ptr.vmem [resolvable:$true] %s25
      %31 = dma.hbm_to_vmem [thread:$0]  %s2, 256, %s26, [#allocation3], 128, 128, 8
    $region13: #{tpu_custom_call.1} parent=1 // pred_fallthru
      _
    // Predicated region
    $region14: #{tpu_custom_call.1} parent=1 // pred_check
      _
    $region15: #{tpu_custom_call.1} parent=1 // pred_check_branch
      %33 = sbr.rel (0) target = $region17
    $region16: #{tpu_custom_call.1} parent=1 // pred_region
      _
    $region17: #{tpu_custom_call.1} parent=1 // pred_fallthru
      _
    // Predicated region
    $region18: #{tpu_custom_call.1} parent=1 // pred_check
      _
    $region19: #{tpu_custom_call.1} parent=1 // pred_check_branch
      %35 = sbr.rel (0) target = $region21
    $region20: #{tpu_custom_call.1} parent=1 // pred_region
      _
    $region21: #{tpu_custom_call.1} parent=1 // pred_fallthru
      _
    // Predicated region
    $region22: #{tpu_custom_call.1} parent=1 // pred_check
      _
    $region23: #{tpu_custom_call.1} parent=1 // pred_check_branch
      %37 = sbr.rel (0) target = $region25
    $region24: #{tpu_custom_call.1} parent=1 // pred_region
      _
    $region25: #{tpu_custom_call.1} parent=1 // pred_fallthru
      _
    // Predicated region
    $region26: #{tpu_custom_call.1} parent=1 // pred_check
      _
    $region27: #{tpu_custom_call.1} parent=1 // pred_check_branch
      %39 = sbr.rel (0) target = $region29
    $region28: #{tpu_custom_call.1} parent=1 // pred_region
      _
    $region29: #{tpu_custom_call.1} parent=1 // pred_fallthru
      _
    // Predicated region
    $region30: #{tpu_custom_call.1} parent=1 // pred_check
      _
    $region31: #{tpu_custom_call.1} parent=1 // pred_check_branch
      %41 = sbr.rel (0) target = $region33
    $region32: #{tpu_custom_call.1} parent=1 // pred_region
      _
    $region33: #{tpu_custom_call.1} parent=1 // pred_fallthru
      _
    // Predicated region
    $region34: #{tpu_custom_call.1} parent=1 // pred_check
      _
    $region35: #{tpu_custom_call.1} parent=1 // pred_check_branch
      %43 = sbr.rel (0) target = $region37
    $region36: #{tpu_custom_call.1} parent=1 // pred_region
      _
    $region37: #{tpu_custom_call.1} parent=1 // pred_fallthru
      _
    // Predicated region
    $region38: #{tpu_custom_call.1} parent=1 // pred_check
      _
    $region39: #{tpu_custom_call.1} parent=1 // pred_check_branch
      %45 = sbr.rel (0) target = $region41
    $region40: #{tpu_custom_call.1} parent=1 // pred_region
      %46 = dma.done [#allocation3], 256
    $region41: #{tpu_custom_call.1} parent=1 // pred_fallthru
      _
    %v47 = vld [vmem:[%s0] sm:$0x3]
    %v48 = vld [vmem:[#allocation2] sm:$0xff]
    %v49 = vld [vmem:[#allocation2 + $0x8] sm:$0xf]
    %v50 = vld [vmem:[%s1] sm:$0x3]
    %v51 = vld [vmem:[%s3] sm:$0xf]
    %vm52 = vcmask 31744
    %v54 = vsel %vm52, %v50, 0
    %vm56 = vcmask 1043456
    %v58 = vsel %vm56, %v51, 0
    %60 = vmatprep.subr.mxu0 0.0
    %61 = vmatpush1.msra.mxu0 0.0
    %62 = vmatprep.subr.mxu0 0.0
    %63 = vmatpush1.msra.mxu0 0.0
    %64 = vmatprep.subr.mxu0 0.0
    %65 = vmatpush1.msra.mxu0 0.0
    %66 = vmatprep.subr.mxu0 0.0
    %67 = vmatpush1.msra.mxu0 0.0
    %68 = vmatprep.subr.mxu0 0.0
    %69 = vmatpush1.msra.mxu0 0.0
    %70 = vmatprep.subr.mxu0 0.0
    %71 = vmatpush1.msra.mxu0 0.0
    %72 = vmatprep.subr.mxu0 0.0
    %73 = vmatpush1.msra.mxu0 0.0
    %74 = vmatprep.subr.mxu0 0.0
    %75 = vmatpush1.msra.mxu0 0.0
    %76 = vmatprep.subr.mxu0 0.0
    %77 = vmatpush1.msra.mxu0 0.0
    %78 = vmatprep.subr.mxu0 0.0
    %79 = vmatpush1.msra.mxu0 0.0
    %80 = vmatprep.subr.mxu0 0.0
    %81 = vmatpush1.msra.mxu0 0.0
    %82 = vmatprep.subr.mxu0 0.0
    %83 = vmatpush1.msra.mxu0 0.0
    %84 = vmatprep.subr.mxu0 0.0
    %85 = vmatpush1.msra.mxu0 0.0
    %86 = vmatprep.subr.mxu0 0.0
    %87 = vmatpush1.msra.mxu0 0.0
    %88 = vmatprep.subr.mxu0 0.0
    %89 = vmatpush1.msra.mxu0 0.0
    %90 = vmatprep.subr.mxu0 0.0
    %91 = vmatpush1.msra.mxu0 %v58
    %92 = vmatprep.subr.mxu0 0.0
    %93 = vmatpush2.msra.mxu0 0.0
    %94 = vmatprep.subr.mxu0 0.0
    %95 = vmatpush2.msra.mxu0 0.0
    %96 = vmatprep.subr.mxu0 0.0
    %97 = vmatpush2.msra.mxu0 0.0
    %98 = vmatprep.subr.mxu0 0.0
    %99 = vmatpush2.msra.mxu0 0.0
    %100 = vmatprep.subr.mxu0 0.0
    %101 = vmatpush2.msra.mxu0 0.0
    %102 = vmatprep.subr.mxu0 0.0
    %103 = vmatpush2.msra.mxu0 0.0
    %104 = vmatprep.subr.mxu0 0.0
    %105 = vmatpush2.msra.mxu0 0.0
    %106 = vmatprep.subr.mxu0 0.0
    %107 = vmatpush2.msra.mxu0 0.0
    %108 = vmatprep.subr.mxu0 0.0
    %109 = vmatpush2.msra.mxu0 0.0
    %110 = vmatprep.subr.mxu0 0.0
    %111 = vmatpush2.msra.mxu0 0.0
    %112 = vmatprep.subr.mxu0 0.0
    %113 = vmatpush2.msra.mxu0 0.0
    %114 = vmatprep.subr.mxu0 0.0
    %115 = vmatpush2.msra.mxu0 0.0
    %116 = vmatprep.subr.mxu0 0.0
    %117 = vmatpush2.msra.mxu0 0.0
    %118 = vmatprep.subr.mxu0 0.0
    %119 = vmatpush2.msra.mxu0 0.0
    %120 = vmatprep.subr.mxu0 0.0
    %121 = vmatpush2.msra.mxu0 0.0
    %122 = vmatprep.subr.mxu0 0.0
    %123 = vmatpush2.msra.mxu0 0.0
    %124 = vmatprep.mubr.f32.mxu0 0.0
    %125 = vmatmul.mubr.f32.gmra.mxu0 %v54
    %v126 = vpop.f32.mrf.mxu0
    %v127 = vadd.f32 0.0, %v126
    %v128 = vpop.f32.mrf.mxu0
    %129 = vdwg.mxu0
    %vm130 = vcmask 97280
    %v132 = vsel %vm130, %v47, 0
    %v135 = vsel %vm56, %v49, 0
    %137 = vmatprep.subr.mxu0 0.0
    %138 = vmatpush1.msra.mxu0 0.0
    %139 = vmatprep.subr.mxu0 0.0
    %140 = vmatpush1.msra.mxu0 0.0
    %141 = vmatprep.subr.mxu0 0.0
    %142 = vmatpush1.msra.mxu0 0.0
    %143 = vmatprep.subr.mxu0 0.0
    %144 = vmatpush1.msra.mxu0 0.0
    %145 = vmatprep.subr.mxu0 0.0
    %146 = vmatpush1.msra.mxu0 0.0
    %147 = vmatprep.subr.mxu0 0.0
    %148 = vmatpush1.msra.mxu0 0.0
    %149 = vmatprep.subr.mxu0 0.0
    %150 = vmatpush1.msra.mxu0 0.0
    %151 = vmatprep.subr.mxu0 0.0
    %152 = vmatpush1.msra.mxu0 0.0
    %153 = vmatprep.subr.mxu0 0.0
    %154 = vmatpush1.msra.mxu0 0.0
    %155 = vmatprep.subr.mxu0 0.0
    %156 = vmatpush1.msra.mxu0 0.0
    %157 = vmatprep.subr.mxu0 0.0
    %158 = vmatpush1.msra.mxu0 0.0
    %159 = vmatprep.subr.mxu0 0.0
    %160 = vmatpush1.msra.mxu0 0.0
    %161 = vmatprep.subr.mxu0 0.0
    %162 = vmatpush1.msra.mxu0 0.0
    %163 = vmatprep.subr.mxu0 0.0
    %164 = vmatpush1.msra.mxu0 0.0
    %165 = vmatprep.subr.mxu0 0.0
    %166 = vmatpush1.msra.mxu0 %v135
    %167 = vmatprep.subr.mxu0 0.0
    %168 = vmatpush1.msra.mxu0 %v48
    %169 = vmatprep.subr.mxu0 0.0
    %170 = vmatpush2.msra.mxu0 0.0
    %171 = vmatprep.subr.mxu0 0.0
    %172 = vmatpush2.msra.mxu0 0.0
    %173 = vmatprep.subr.mxu0 0.0
    %174 = vmatpush2.msra.mxu0 0.0
    %175 = vmatprep.subr.mxu0 0.0
    %176 = vmatpush2.msra.mxu0 0.0
    %177 = vmatprep.subr.mxu0 0.0
    %178 = vmatpush2.msra.mxu0 0.0
    %179 = vmatprep.subr.mxu0 0.0
    %180 = vmatpush2.msra.mxu0 0.0
    %181 = vmatprep.subr.mxu0 0.0
    %182 = vmatpush2.msra.mxu0 0.0
    %183 = vmatprep.subr.mxu0 0.0
    %184 = vmatpush2.msra.mxu0 0.0
    %185 = vmatprep.subr.mxu0 0.0
    %186 = vmatpush2.msra.mxu0 0.0
    %187 = vmatprep.subr.mxu0 0.0
    %188 = vmatpush2.msra.mxu0 0.0
    %189 = vmatprep.subr.mxu0 0.0
    %190 = vmatpush2.msra.mxu0 0.0
    %191 = vmatprep.subr.mxu0 0.0
    %192 = vmatpush2.msra.mxu0 0.0
    %193 = vmatprep.subr.mxu0 0.0
    %194 = vmatpush2.msra.mxu0 0.0
    %195 = vmatprep.subr.mxu0 0.0
    %196 = vmatpush2.msra.mxu0 0.0
    %197 = vmatprep.subr.mxu0 0.0
    %198 = vmatpush2.msra.mxu0 0.0
    %199 = vmatprep.subr.mxu0 0.0
    %200 = vmatpush2.msra.mxu0 0.0
    %201 = vmatprep.mubr.f32.mxu0 0.0
    %202 = vmatmul.mubr.f32.gmra.mxu0 %v132
    %v203 = vpop.f32.mrf.mxu0
    %v204 = vadd.f32 %v127, %v203
    %v205 = vpop.f32.mrf.mxu0
    %206 = vdwg.mxu0
    %v207 = vld [vmem:[%s4] sm:$0x1]
    %v209 = vlaneseq
    %v210 = vshrl.u32 %v209, 7
    %v211 = vsub.s32 0, %v210
    %v212 = vrot.slane %v207, %v211
    %v214 = vadd.f32 %v204, %v212
    %v215 = vmax.f32 %v214, 0.0
    %v216 = vld [vmem:[%s5] sm:$0xff]
    %v217 = vld [vmem:[%s5 + $0x8] sm:$0xff]
    %v218 = vld [vmem:[%s5 + $0x10] sm:$0xff]
    %v219 = vld [vmem:[%s5 + $0x18] sm:$0xff]
    %v220 = vld [vmem:[%s5 + $0x20] sm:$0xff]
    %v221 = vld [vmem:[%s5 + $0x28] sm:$0xff]
    %v222 = vld [vmem:[%s5 + $0x30] sm:$0xff]
    %v223 = vld [vmem:[%s5 + $0x38] sm:$0xff]
    %v224 = vld [vmem:[%s5 + $0x40] sm:$0xff]
    %v225 = vld [vmem:[%s5 + $0x48] sm:$0xff]
    %v226 = vld [vmem:[%s5 + $0x50] sm:$0xff]
    %v227 = vld [vmem:[%s5 + $0x58] sm:$0xff]
    %v228 = vld [vmem:[%s5 + $0x60] sm:$0xff]
    %v229 = vld [vmem:[%s5 + $0x68] sm:$0xff]
    %v230 = vld [vmem:[%s5 + $0x70] sm:$0xff]
    %v231 = vld [vmem:[%s5 + $0x78] sm:$0xff]
    %v232 = vld [vmem:[%s6] sm:$0x1]
    %v234 = vlaneseq
    %v235 = vshrl.u32 %v234, 7
    %v236 = vsub.s32 0, %v235
    %v237 = vrot.slane %v232, %v236
    %239 = vmatprep.subr.mxu0 0.0
    %240 = vmatpush1.msra.mxu0 %v231
    %241 = vmatprep.subr.mxu0 0.0
    %242 = vmatpush1.msra.mxu0 %v230
    %243 = vmatprep.subr.mxu0 0.0
    %244 = vmatpush1.msra.mxu0 %v229
    %245 = vmatprep.subr.mxu0 0.0
    %246 = vmatpush1.msra.mxu0 %v228
    %247 = vmatprep.subr.mxu0 0.0
    %248 = vmatpush1.msra.mxu0 %v227
    %249 = vmatprep.subr.mxu0 0.0
    %250 = vmatpush1.msra.mxu0 %v226
    %251 = vmatprep.subr.mxu0 0.0
    %252 = vmatpush1.msra.mxu0 %v225
    %253 = vmatprep.subr.mxu0 0.0
    %254 = vmatpush1.msra.mxu0 %v224
    %255 = vmatprep.subr.mxu0 0.0
    %256 = vmatpush1.msra.mxu0 %v223
    %257 = vmatprep.subr.mxu0 0.0
    %258 = vmatpush1.msra.mxu0 %v222
    %259 = vmatprep.subr.mxu0 0.0
    %260 = vmatpush1.msra.mxu0 %v221
    %261 = vmatprep.subr.mxu0 0.0
    %262 = vmatpush1.msra.mxu0 %v220
    %263 = vmatprep.subr.mxu0 0.0
    %264 = vmatpush1.msra.mxu0 %v219
    %265 = vmatprep.subr.mxu0 0.0
    %266 = vmatpush1.msra.mxu0 %v218
    %267 = vmatprep.subr.mxu0 0.0
    %268 = vmatpush1.msra.mxu0 %v217
    %269 = vmatprep.subr.mxu0 0.0
    %270 = vmatpush1.msra.mxu0 %v216
    %271 = vmatprep.subr.mxu0 0.0
    %272 = vmatpush2.msra.mxu0 0.0
    %273 = vmatprep.subr.mxu0 0.0
    %274 = vmatpush2.msra.mxu0 0.0
    %275 = vmatprep.subr.mxu0 0.0
    %276 = vmatpush2.msra.mxu0 0.0
    %277 = vmatprep.subr.mxu0 0.0
    %278 = vmatpush2.msra.mxu0 0.0
    %279 = vmatprep.subr.mxu0 0.0
    %280 = vmatpush2.msra.mxu0 0.0
    %281 = vmatprep.subr.mxu0 0.0
    %282 = vmatpush2.msra.mxu0 0.0
    %283 = vmatprep.subr.mxu0 0.0
    %284 = vmatpush2.msra.mxu0 0.0
    %285 = vmatprep.subr.mxu0 0.0
    %286 = vmatpush2.msra.mxu0 0.0
    %287 = vmatprep.subr.mxu0 0.0
    %288 = vmatpush2.msra.mxu0 0.0
    %289 = vmatprep.subr.mxu0 0.0
    %290 = vmatpush2.msra.mxu0 0.0
    %291 = vmatprep.subr.mxu0 0.0
    %292 = vmatpush2.msra.mxu0 0.0
    %293 = vmatprep.subr.mxu0 0.0
    %294 = vmatpush2.msra.mxu0 0.0
    %295 = vmatprep.subr.mxu0 0.0
    %296 = vmatpush2.msra.mxu0 0.0
    %297 = vmatprep.subr.mxu0 0.0
    %298 = vmatpush2.msra.mxu0 0.0
    %299 = vmatprep.subr.mxu0 0.0
    %300 = vmatpush2.msra.mxu0 0.0
    %301 = vmatprep.subr.mxu0 0.0
    %302 = vmatpush2.msra.mxu0 0.0
    %303 = vmatprep.mubr.f32.mxu0 0.0
    %304 = vmatmul.mubr.f32.gmra.mxu0 %v215
    %v305 = vpop.f32.mrf.mxu0
    %v306 = vadd.f32 %v237, %v305
    %v307 = vpop.f32.mrf.mxu0
    %308 = vdwg.mxu0
    %v309 = vmax.f32 %v306, 0.0
    %v310 = vld [vmem:[%s7] sm:$0xff]
    %v311 = vld [vmem:[%s7 + $0x8] sm:$0xff]
    %v312 = vld [vmem:[%s7 + $0x10] sm:$0xff]
    %v313 = vld [vmem:[%s7 + $0x18] sm:$0xff]
    %v314 = vld [vmem:[%s7 + $0x20] sm:$0xff]
    %v315 = vld [vmem:[%s7 + $0x28] sm:$0xff]
    %v316 = vld [vmem:[%s7 + $0x30] sm:$0xff]
    %v317 = vld [vmem:[%s7 + $0x38] sm:$0xff]
    %v318 = vld [vmem:[%s7 + $0x40] sm:$0xff]
    %v319 = vld [vmem:[%s7 + $0x48] sm:$0xff]
    %v320 = vld [vmem:[%s7 + $0x50] sm:$0xff]
    %v321 = vld [vmem:[%s7 + $0x58] sm:$0xff]
    %v322 = vld [vmem:[%s7 + $0x60] sm:$0xff]
    %v323 = vld [vmem:[%s7 + $0x68] sm:$0xff]
    %v324 = vld [vmem:[%s7 + $0x70] sm:$0xff]
    %v325 = vld [vmem:[%s7 + $0x78] sm:$0xff]
    %v326 = vld [vmem:[%s8] sm:$0x1]
    %v328 = vlaneseq
    %v329 = vshrl.u32 %v328, 7
    %v330 = vsub.s32 0, %v329
    %v331 = vrot.slane %v326, %v330
    %333 = vmatprep.subr.mxu0 0.0
    %334 = vmatpush1.msra.mxu0 %v325
    %335 = vmatprep.subr.mxu0 0.0
    %336 = vmatpush1.msra.mxu0 %v324
    %337 = vmatprep.subr.mxu0 0.0
    %338 = vmatpush1.msra.mxu0 %v323
    %339 = vmatprep.subr.mxu0 0.0
    %340 = vmatpush1.msra.mxu0 %v322
    %341 = vmatprep.subr.mxu0 0.0
    %342 = vmatpush1.msra.mxu0 %v321
    %343 = vmatprep.subr.mxu0 0.0
    %344 = vmatpush1.msra.mxu0 %v320
    %345 = vmatprep.subr.mxu0 0.0
    %346 = vmatpush1.msra.mxu0 %v319
    %347 = vmatprep.subr.mxu0 0.0
    %348 = vmatpush1.msra.mxu0 %v318
    %349 = vmatprep.subr.mxu0 0.0
    %350 = vmatpush1.msra.mxu0 %v317
    %351 = vmatprep.subr.mxu0 0.0
    %352 = vmatpush1.msra.mxu0 %v316
    %353 = vmatprep.subr.mxu0 0.0
    %354 = vmatpush1.msra.mxu0 %v315
    %355 = vmatprep.subr.mxu0 0.0
    %356 = vmatpush1.msra.mxu0 %v314
    %357 = vmatprep.subr.mxu0 0.0
    %358 = vmatpush1.msra.mxu0 %v313
    %359 = vmatprep.subr.mxu0 0.0
    %360 = vmatpush1.msra.mxu0 %v312
    %361 = vmatprep.subr.mxu0 0.0
    %362 = vmatpush1.msra.mxu0 %v311
    %363 = vmatprep.subr.mxu0 0.0
    %364 = vmatpush1.msra.mxu0 %v310
    %365 = vmatprep.subr.mxu0 0.0
    %366 = vmatpush2.msra.mxu0 0.0
    %367 = vmatprep.subr.mxu0 0.0
    %368 = vmatpush2.msra.mxu0 0.0
    %369 = vmatprep.subr.mxu0 0.0
    %370 = vmatpush2.msra.mxu0 0.0
    %371 = vmatprep.subr.mxu0 0.0
    %372 = vmatpush2.msra.mxu0 0.0
    %373 = vmatprep.subr.mxu0 0.0
    %374 = vmatpush2.msra.mxu0 0.0
    %375 = vmatprep.subr.mxu0 0.0
    %376 = vmatpush2.msra.mxu0 0.0
    %377 = vmatprep.subr.mxu0 0.0
    %378 = vmatpush2.msra.mxu0 0.0
    %379 = vmatprep.subr.mxu0 0.0
    %380 = vmatpush2.msra.mxu0 0.0
    %381 = vmatprep.subr.mxu0 0.0
    %382 = vmatpush2.msra.mxu0 0.0
    %383 = vmatprep.subr.mxu0 0.0
    %384 = vmatpush2.msra.mxu0 0.0
    %385 = vmatprep.subr.mxu0 0.0
    %386 = vmatpush2.msra.mxu0 0.0
    %387 = vmatprep.subr.mxu0 0.0
    %388 = vmatpush2.msra.mxu0 0.0
    %389 = vmatprep.subr.mxu0 0.0
    %390 = vmatpush2.msra.mxu0 0.0
    %391 = vmatprep.subr.mxu0 0.0
    %392 = vmatpush2.msra.mxu0 0.0
    %393 = vmatprep.subr.mxu0 0.0
    %394 = vmatpush2.msra.mxu0 0.0
    %395 = vmatprep.subr.mxu0 0.0
    %396 = vmatpush2.msra.mxu0 0.0
    %397 = vmatprep.mubr.f32.mxu0 0.0
    %398 = vmatmul.mubr.f32.gmra.mxu0 %v309
    %v399 = vpop.f32.mrf.mxu0
    %v400 = vadd.f32 %v331, %v399
    %v401 = vpop.f32.mrf.mxu0
    %402 = vdwg.mxu0
    %vm403 = vcmask 9216
    %404 = vst.msk [vmem:[#allocation5] sm:$0x3] %vm403, %v400
    // Predicated region
    $region42: #{tpu_custom_call.1} parent=1 // pred_check
      _
    $region43: #{tpu_custom_call.1} parent=1 // pred_check_branch
      %406 = sbr.rel (0) target = $region45
    $region44: #{tpu_custom_call.1} parent=1 // pred_region
      %s408 = ssub.s32 32, 32
      %409 = vsyncadd [#allocation4], %s408
      %s411 = sshll.u32 [#allocation5], 4
      %s412 = int_to_ptr.vmem [resolvable:$true] %s411
      %414 = dma.vmem_to_hbm [thread:$0]  %s412, 32, %s9, [#allocation4]
    $region45: #{tpu_custom_call.1} parent=1 // pred_fallthru
      _
    // Predicated region
    $region46: #{tpu_custom_call.1} parent=1 // pred_check
      _
    $region47: #{tpu_custom_call.1} parent=1 // pred_check_branch
      %416 = sbr.rel (0) target = $region49
    $region48: #{tpu_custom_call.1} parent=1 // pred_region
      %417 = dma.done [#allocation4], 32
    $region49: #{tpu_custom_call.1} parent=1 // pred_fallthru
      _
    %418 = vsyncpa [#allocation3], 1
    %419 = vsyncpa [#allocation4], 1

</llo_original>
